<compile_context>
chip_gen: v7x
topology: tpu7x:2x2x1
jax: 0.10.0
libtpu: 0.0.40
codegen_flags: <defaults>
</compile_context>

<pallas_src>
import jax
import jax.numpy as jnp
from jax.experimental import pallas as pl
from jax.experimental.pallas import tpu as pltpu


def _round_up(n, m):
    return ((n + m - 1) // m) * m


def sae_forward_kernel(x_ref,
                       w1_ref, b1_ref,
                       w2_ref, b2_ref,
                       w3_ref, b3_ref,
                       w4_ref, b4_ref,
                       o_ref):
    compute_dtype = w1_ref.dtype

    x = x_ref[...]

    # fc1 + sigmoid  (MXU accumulates in f32; sigmoid in f32 via the EUP;
    # next MXU pass fed in the compute dtype).
    h = jnp.dot(x, w1_ref[...], preferred_element_type=jnp.float32) + b1_ref[...]
    h = jax.nn.sigmoid(h).astype(compute_dtype)

    # fc2 + sigmoid
    h = jnp.dot(h, w2_ref[...], preferred_element_type=jnp.float32) + b2_ref[...]
    h = jax.nn.sigmoid(h).astype(compute_dtype)

    # fc3 + sigmoid
    h = jnp.dot(h, w3_ref[...], preferred_element_type=jnp.float32) + b3_ref[...]
    h = jax.nn.sigmoid(h).astype(compute_dtype)

    # fc4 (decoder output, no activation)
    out = jnp.dot(h, w4_ref[...], preferred_element_type=jnp.float32) + b4_ref[...]
    o_ref[...] = out.astype(o_ref.dtype)


def sae_forward(x, params, *,
                block_batch=512,
                compute_dtype=jnp.float32,
                vmem_limit_bytes=64 << 20):
    """x: [batch, nb_movies] float32.
    params: dict of (w_i, b_i); weights stored [in_features, out_features],
    biases [1, out_features]."""
    batch, nb_movies = x.shape
    d1 = params["w1"].shape[1]   # 20
    d2 = params["w2"].shape[1]   # 10
    d3 = params["w3"].shape[1]   # 20
    assert params["w4"].shape[1] == nb_movies

    # Lane-align every feature dim to 128 so all tiles are (8,128)-aligned.
    nm_p = _round_up(nb_movies, 128)
    d1_p = _round_up(d1, 128)
    d2_p = _round_up(d2, 128)
    d3_p = _round_up(d3, 128)

    # Batch tile: multiple of 8 sublanes, capped at block_batch, no larger
    # than the (padded-to-8) batch itself.
    assert block_batch % 8 == 0
    tb = min(block_batch, _round_up(batch, 8))
    padded_batch = _round_up(batch, tb)

    def pad2(a, rows, cols):
        r, c = a.shape
        if r == rows and c == cols:
            return a
        return jnp.pad(a, ((0, rows - r), (0, cols - c)))

    # Zero-padding is semantically inert: padded x columns hit zero w1 rows;
    # padded activation columns (sigmoid(0)=0.5) hit zero rows of the next
    # weight; padded output columns are sliced off below.
    x_p = pad2(x, padded_batch, nm_p).astype(compute_dtype)
    w1 = pad2(params["w1"], nm_p, d1_p).astype(compute_dtype)
    w2 = pad2(params["w2"], d1_p, d2_p).astype(compute_dtype)
    w3 = pad2(params["w3"], d2_p, d3_p).astype(compute_dtype)
    w4 = pad2(params["w4"], d3_p, nm_p).astype(compute_dtype)
    b1 = pad2(params["b1"], 1, d1_p).astype(jnp.float32)
    b2 = pad2(params["b2"], 1, d2_p).astype(jnp.float32)
    b3 = pad2(params["b3"], 1, d3_p).astype(jnp.float32)
    b4 = pad2(params["b4"], 1, nm_p).astype(jnp.float32)

    grid = (padded_batch // tb,)

    batch_tile = pl.BlockSpec((tb, nm_p), lambda i: (i, 0))
    resident = lambda shape: pl.BlockSpec(shape, lambda i: (0, 0))

    in_specs = [
        batch_tile,                 # x
        resident((nm_p, d1_p)),     # w1
        resident((1, d1_p)),        # b1
        resident((d1_p, d2_p)),     # w2
        resident((1, d2_p)),        # b2
        resident((d2_p, d3_p)),     # w3
        resident((1, d3_p)),        # b3
        resident((d3_p, nm_p)),     # w4
        resident((1, nm_p)),        # b4
    ]

    out = pl.pallas_call(
        sae_forward_kernel,
        out_shape=jax.ShapeDtypeStruct((padded_batch, nm_p), jnp.float32),
        grid=grid,
        in_specs=in_specs,
        out_specs=batch_tile,
        compiler_params=pltpu.CompilerParams(
            dimension_semantics=("parallel",),
            vmem_limit_bytes=vmem_limit_bytes),
    )(x_p, w1, b1, w2, b2, w3, b3, w4, b4)

    return out[:batch, :nb_movies]


def init_sae_params(key, nb_movies):
    """PyTorch-default-style init (U(-1/sqrt(fan_in), 1/sqrt(fan_in))),
    deterministic via PRNGKey.  Weights stored as [in, out]."""
    dims = [(nb_movies, 20), (20, 10), (10, 20), (20, nb_movies)]
    params = {}
    for i, (fan_in, fan_out) in enumerate(dims, start=1):
        key, kw, kb = jax.random.split(key, 3)
        bound = 1.0 / (fan_in ** 0.5)
        params[f"w{i}"] = jax.random.uniform(
            kw, (fan_in, fan_out), jnp.float32, minval=-bound, maxval=bound)
        params[f"b{i}"] = jax.random.uniform(
            kb, (1, fan_out), jnp.float32, minval=-bound, maxval=bound)
    return params


def sae_forward_ref(x, params):
    """Plain-JAX reference for sanity checking."""
    h = jax.nn.sigmoid(x @ params["w1"] + params["b1"])
    h = jax.nn.sigmoid(h @ params["w2"] + params["b2"])
    h = jax.nn.sigmoid(h @ params["w3"] + params["b3"])
    return h @ params["w4"] + params["b4"]


if __name__ == "__main__":
    nb_movies = 250   # small synthetic stand-in; NOT a lane multiple on purpose
    batch = 100       # deliberately NOT a multiple of the batch tile

    key = jax.random.PRNGKey(0)
    key, kx = jax.random.split(key)
    # Ratings in [0, 5], like the MovieLens-style input of the original script.
    x = jax.random.uniform(kx, (batch, nb_movies), jnp.float32,
                           minval=0.0, maxval=5.0)

    params = init_sae_params(key, nb_movies)
    ref = sae_forward_ref(x, params)

    # f32 path, small block so the grid (2 steps) and the padded edge tile
    # are actually exercised.
    out_f32 = sae_forward(x, params, block_batch=64,
                          compute_dtype=jnp.float32)
    out_f32 = jax.block_until_ready(out_f32)
    assert out_f32.shape == (batch, nb_movies)
    assert jnp.allclose(out_f32, ref, atol=1e-4, rtol=1e-4)

    # bf16 compute path (byte-saving config on v6e/v7x); looser tolerance
    # for the reduced-precision matmul inputs.
    out_bf16 = sae_forward(x, params, block_batch=64,
                           compute_dtype=jnp.bfloat16)
    out_bf16 = jax.block_until_ready(out_bf16)
    assert out_bf16.shape == (batch, nb_movies)
    assert jnp.allclose(out_bf16, ref, atol=5e-2, rtol=5e-2)

    print("KERNEL_OK")
</pallas_src>

<mosaic_0001>
module attributes {stable_mosaic.version = 11 : i64} {
  func.func @sae_forward_kernel(%arg0: i32, %arg1: memref<64x256xf32, #tpu.memory_space<vmem>>, %arg2: memref<256x128xf32, #tpu.memory_space<vmem>>, %arg3: memref<1x128xf32, #tpu.memory_space<vmem>>, %arg4: memref<128x128xf32, #tpu.memory_space<vmem>>, %arg5: memref<1x128xf32, #tpu.memory_space<vmem>>, %arg6: memref<128x128xf32, #tpu.memory_space<vmem>>, %arg7: memref<1x128xf32, #tpu.memory_space<vmem>>, %arg8: memref<128x256xf32, #tpu.memory_space<vmem>>, %arg9: memref<1x256xf32, #tpu.memory_space<vmem>>, %arg10: memref<64x256xf32, #tpu.memory_space<vmem>>) attributes {dimension_semantics = [#tpu.dimension_semantics<parallel>], iteration_bounds = array<i64: 2>, scalar_prefetch = 0 : i64, scratch_operands = 0 : i64, tpu.core_type = #tpu.core_type<tc>, window_params = [{transform_indices = @transform_0, window_bounds = array<i64: 64, 256>}, {pipeline_mode = #tpu.pipeline_mode<synchronous>, transform_indices = @transform_1, window_bounds = array<i64: 256, 128>}, {pipeline_mode = #tpu.pipeline_mode<synchronous>, transform_indices = @transform_2, window_bounds = array<i64: 1, 128>}, {pipeline_mode = #tpu.pipeline_mode<synchronous>, transform_indices = @transform_3, window_bounds = array<i64: 128, 128>}, {pipeline_mode = #tpu.pipeline_mode<synchronous>, transform_indices = @transform_4, window_bounds = array<i64: 1, 128>}, {pipeline_mode = #tpu.pipeline_mode<synchronous>, transform_indices = @transform_5, window_bounds = array<i64: 128, 128>}, {pipeline_mode = #tpu.pipeline_mode<synchronous>, transform_indices = @transform_6, window_bounds = array<i64: 1, 128>}, {pipeline_mode = #tpu.pipeline_mode<synchronous>, transform_indices = @transform_7, window_bounds = array<i64: 128, 256>}, {pipeline_mode = #tpu.pipeline_mode<synchronous>, transform_indices = @transform_8, window_bounds = array<i64: 1, 256>}, {transform_indices = @transform_9, window_bounds = array<i64: 64, 256>}]} {
    %c0 = arith.constant 0 : index
    %c0_0 = arith.constant 0 : index
    %0 = vector.load %arg1[%c0, %c0_0] : memref<64x256xf32, #tpu.memory_space<vmem>>, vector<64x256xf32>
    %c0_1 = arith.constant 0 : index
    %c0_2 = arith.constant 0 : index
    %1 = vector.load %arg2[%c0_1, %c0_2] : memref<256x128xf32, #tpu.memory_space<vmem>>, vector<256x128xf32>
    %cst = arith.constant dense<0.000000e+00> : vector<64x128xf32>
    %2 = tpu.matmul %0, %1, %cst {dimension_numbers = #tpu.dot_dimension_numbers<[1], [0], [0], [1], [0, 0, 1, 1], [], []>} : vector<64x256xf32>, vector<256x128xf32>, vector<64x128xf32> -> vector<64x128xf32>
    %c0_3 = arith.constant 0 : index
    %c0_4 = arith.constant 0 : index
    %3 = vector.load %arg3[%c0_3, %c0_4] : memref<1x128xf32, #tpu.memory_space<vmem>>, vector<1x128xf32>
    %4 = vector.broadcast %3 : vector<1x128xf32> to vector<64x128xf32>
    %5 = arith.addf %2, %4 : vector<64x128xf32>
    %6 = arith.negf %5 : vector<64x128xf32>
    %7 = math.exp %6 : vector<64x128xf32>
    %cst_5 = arith.constant 1.000000e+00 : f32
    %8 = vector.broadcast %cst_5 : f32 to vector<64x128xf32>
    %9 = arith.addf %8, %7 : vector<64x128xf32>
    %10 = arith.divf %8, %9 : vector<64x128xf32>
    %c0_6 = arith.constant 0 : index
    %c0_7 = arith.constant 0 : index
    %11 = vector.load %arg4[%c0_6, %c0_7] : memref<128x128xf32, #tpu.memory_space<vmem>>, vector<128x128xf32>
    %cst_8 = arith.constant dense<0.000000e+00> : vector<64x128xf32>
    %12 = tpu.matmul %10, %11, %cst_8 {dimension_numbers = #tpu.dot_dimension_numbers<[1], [0], [0], [1], [0, 0, 1, 1], [], []>} : vector<64x128xf32>, vector<128x128xf32>, vector<64x128xf32> -> vector<64x128xf32>
    %c0_9 = arith.constant 0 : index
    %c0_10 = arith.constant 0 : index
    %13 = vector.load %arg5[%c0_9, %c0_10] : memref<1x128xf32, #tpu.memory_space<vmem>>, vector<1x128xf32>
    %14 = vector.broadcast %13 : vector<1x128xf32> to vector<64x128xf32>
    %15 = arith.addf %12, %14 : vector<64x128xf32>
    %16 = arith.negf %15 : vector<64x128xf32>
    %17 = math.exp %16 : vector<64x128xf32>
    %cst_11 = arith.constant 1.000000e+00 : f32
    %18 = vector.broadcast %cst_11 : f32 to vector<64x128xf32>
    %19 = arith.addf %18, %17 : vector<64x128xf32>
    %20 = arith.divf %18, %19 : vector<64x128xf32>
    %c0_12 = arith.constant 0 : index
    %c0_13 = arith.constant 0 : index
    %21 = vector.load %arg6[%c0_12, %c0_13] : memref<128x128xf32, #tpu.memory_space<vmem>>, vector<128x128xf32>
    %cst_14 = arith.constant dense<0.000000e+00> : vector<64x128xf32>
    %22 = tpu.matmul %20, %21, %cst_14 {dimension_numbers = #tpu.dot_dimension_numbers<[1], [0], [0], [1], [0, 0, 1, 1], [], []>} : vector<64x128xf32>, vector<128x128xf32>, vector<64x128xf32> -> vector<64x128xf32>
    %c0_15 = arith.constant 0 : index
    %c0_16 = arith.constant 0 : index
    %23 = vector.load %arg7[%c0_15, %c0_16] : memref<1x128xf32, #tpu.memory_space<vmem>>, vector<1x128xf32>
    %24 = vector.broadcast %23 : vector<1x128xf32> to vector<64x128xf32>
    %25 = arith.addf %22, %24 : vector<64x128xf32>
    %26 = arith.negf %25 : vector<64x128xf32>
    %27 = math.exp %26 : vector<64x128xf32>
    %cst_17 = arith.constant 1.000000e+00 : f32
    %28 = vector.broadcast %cst_17 : f32 to vector<64x128xf32>
    %29 = arith.addf %28, %27 : vector<64x128xf32>
    %30 = arith.divf %28, %29 : vector<64x128xf32>
    %c0_18 = arith.constant 0 : index
    %c0_19 = arith.constant 0 : index
    %31 = vector.load %arg8[%c0_18, %c0_19] : memref<128x256xf32, #tpu.memory_space<vmem>>, vector<128x256xf32>
    %cst_20 = arith.constant dense<0.000000e+00> : vector<64x256xf32>
    %32 = tpu.matmul %30, %31, %cst_20 {dimension_numbers = #tpu.dot_dimension_numbers<[1], [0], [0], [1], [0, 0, 1, 1], [], []>} : vector<64x128xf32>, vector<128x256xf32>, vector<64x256xf32> -> vector<64x256xf32>
    %c0_21 = arith.constant 0 : index
    %c0_22 = arith.constant 0 : index
    %33 = vector.load %arg9[%c0_21, %c0_22] : memref<1x256xf32, #tpu.memory_space<vmem>>, vector<1x256xf32>
    %34 = vector.broadcast %33 : vector<1x256xf32> to vector<64x256xf32>
    %35 = arith.addf %32, %34 : vector<64x256xf32>
    %c0_23 = arith.constant 0 : index
    %c0_24 = arith.constant 0 : index
    %36 = vector.load %arg10[%c0_23, %c0_24] : memref<64x256xf32, #tpu.memory_space<vmem>>, vector<64x256xf32>
    tpu.vector_store %arg10[%c0_23, %c0_24], %35 {strides = array<i32>} : memref<64x256xf32, #tpu.memory_space<vmem>>, vector<64x256xf32>,
    return
  }
  func.func @transform_0(%arg0: i32) -> (i32, i32) {
    %c0_i32 = arith.constant 0 : i32
    %c0_i32_0 = arith.constant 0 : i32
    return %arg0, %c0_i32 : i32, i32
  }
  func.func @transform_1(%arg0: i32) -> (i32, i32) {
    %c0_i32 = arith.constant 0 : i32
    %c0_i32_0 = arith.constant 0 : i32
    %c0_i32_1 = arith.constant 0 : i32
    return %c0_i32, %c0_i32_0 : i32, i32
  }
  func.func @transform_2(%arg0: i32) -> (i32, i32) {
    %c0_i32 = arith.constant 0 : i32
    %c0_i32_0 = arith.constant 0 : i32
    %c0_i32_1 = arith.constant 0 : i32
    return %c0_i32, %c0_i32_0 : i32, i32
  }
  func.func @transform_3(%arg0: i32) -> (i32, i32) {
    %c0_i32 = arith.constant 0 : i32
    %c0_i32_0 = arith.constant 0 : i32
    %c0_i32_1 = arith.constant 0 : i32
    return %c0_i32, %c0_i32_0 : i32, i32
  }
  func.func @transform_4(%arg0: i32) -> (i32, i32) {
    %c0_i32 = arith.constant 0 : i32
    %c0_i32_0 = arith.constant 0 : i32
    %c0_i32_1 = arith.constant 0 : i32
    return %c0_i32, %c0_i32_0 : i32, i32
  }
  func.func @transform_5(%arg0: i32) -> (i32, i32) {
    %c0_i32 = arith.constant 0 : i32
    %c0_i32_0 = arith.constant 0 : i32
    %c0_i32_1 = arith.constant 0 : i32
    return %c0_i32, %c0_i32_0 : i32, i32
  }
  func.func @transform_6(%arg0: i32) -> (i32, i32) {
    %c0_i32 = arith.constant 0 : i32
    %c0_i32_0 = arith.constant 0 : i32
    %c0_i32_1 = arith.constant 0 : i32
    return %c0_i32, %c0_i32_0 : i32, i32
  }
  func.func @transform_7(%arg0: i32) -> (i32, i32) {
    %c0_i32 = arith.constant 0 : i32
    %c0_i32_0 = arith.constant 0 : i32
    %c0_i32_1 = arith.constant 0 : i32
    return %c0_i32, %c0_i32_0 : i32, i32
  }
  func.func @transform_8(%arg0: i32) -> (i32, i32) {
    %c0_i32 = arith.constant 0 : i32
    %c0_i32_0 = arith.constant 0 : i32
    %c0_i32_1 = arith.constant 0 : i32
    return %c0_i32, %c0_i32_0 : i32, i32
  }
  func.func @transform_9(%arg0: i32) -> (i32, i32) {
    %c0_i32 = arith.constant 0 : i32
    %c0_i32_0 = arith.constant 0 : i32
    return %arg0, %c0_i32 : i32, i32
  }
}

</mosaic_0001>

<llo_original>
// kernel: tpu_custom_call.1
$region0: #{tpu_custom_call.1}
  #allocation0 [shape = 'u32[]', space=smem, size = 0x4, offset = 0x4, fixed_abs, tag = 'smem constant byte address 0x4 - core index']
  #allocation1 [shape = 'u32[144,128]{1,0:T(1,128)}', space=vmem, size = 0x12000, scoped, tag = 'internal scratch']
  %s0 = inlined_call_operand.hbm [shape: f32[128,256], index: 0, kind: input, shape index: {}]
  %s1 = inlined_call_operand.hbm [shape: f32[256,128], index: 1, kind: input, shape index: {}]
  %s2 = inlined_call_operand.hbm [shape: f32[1,128], index: 2, kind: input, shape index: {}]
  %s3 = inlined_call_operand.hbm [shape: f32[128,128], index: 3, kind: input, shape index: {}]
  %s4 = inlined_call_operand.hbm [shape: f32[1,128], index: 4, kind: input, shape index: {}]
  %s5 = inlined_call_operand.hbm [shape: f32[128,128], index: 5, kind: input, shape index: {}]
  %s6 = inlined_call_operand.hbm [shape: f32[1,128], index: 6, kind: input, shape index: {}]
  %s7 = inlined_call_operand.hbm [shape: f32[128,256], index: 7, kind: input, shape index: {}]
  %s8 = inlined_call_operand.hbm [shape: f32[1,256], index: 8, kind: input, shape index: {}]
  %s9 = inlined_call_operand.hbm [shape: f32[128,256], index: 9, kind: output, shape index: {}]
  %s10 = sld [smem:[#allocation0]]
  $region105: #{tpu_custom_call.1} parent=0
    _
  %s12 = ssub.s32 1, %s10
  %s13 = scalar_select 0, %s12, %s10
  $region1: #{tpu_custom_call.1} parent=0
    #allocation2 [shape = 'u8[131072]{0}', space=vmem, size = 0x20000, scoped, tag = 'input window, operand 0']
    #allocation3 [shape = 's32[2]{0}', space=sflag, size = 0x8, scoped, tag = 'scoped memory for tpu_custom_call.1']
    #allocation4 [shape = 's32[2]{0}', space=sflag, size = 0x8, scoped, tag = 'scoped memory for tpu_custom_call.1']
    #allocation5 [shape = 'u8[131072]{0}', space=vmem, size = 0x20000, scoped, tag = 'input window, operand 1, single buffered']
    #allocation6 [shape = 's32[1]{0}', space=sflag, size = 0x4, scoped, tag = 'scoped memory for tpu_custom_call.1']
    #allocation7 [shape = 'u8[512]{0}', space=vmem, size = 0x400, scoped, tag = 'input window, operand 2, single buffered']
    #allocation8 [shape = 'u8[65536]{0}', space=vmem, size = 0x10000, scoped, tag = 'input window, operand 3, single buffered']
    #allocation9 [shape = 's32[1]{0}', space=sflag, size = 0x4, scoped, tag = 'scoped memory for tpu_custom_call.1']
    #allocation10 [shape = 'u8[512]{0}', space=vmem, size = 0x400, scoped, tag = 'input window, operand 4, single buffered']
    #allocation11 [shape = 'u8[65536]{0}', space=vmem, size = 0x10000, scoped, tag = 'input window, operand 5, single buffered']
    #allocation12 [shape = 's32[1]{0}', space=sflag, size = 0x4, scoped, tag = 'scoped memory for tpu_custom_call.1']
    #allocation13 [shape = 'u8[512]{0}', space=vmem, size = 0x400, scoped, tag = 'input window, operand 6, single buffered']
    #allocation14 [shape = 'u8[131072]{0}', space=vmem, size = 0x20000, scoped, tag = 'input window, operand 7, single buffered']
    #allocation15 [shape = 's32[1]{0}', space=sflag, size = 0x4, scoped, tag = 'scoped memory for tpu_custom_call.1']
    #allocation16 [shape = 'u8[1024]{0}', space=vmem, size = 0x400, scoped, tag = 'input window, operand 8, single buffered']
    #allocation17 [shape = 'u8[131072]{0}', space=vmem, size = 0x20000, scoped, tag = 'output window, operand 0']
    %14 = vsyncpa [#allocation3], 0
    %s15 = scalar_lea.sflag [#allocation3], 1
    %16 = vsyncpa %s15, 0
    %17 = vsyncpa [#allocation6], 0
    %18 = vsyncpa [#allocation9], 0
    %19 = vsyncpa [#allocation12], 0
    %20 = vsyncpa [#allocation15], 0
    %21 = vsyncpa [#allocation4], 0
    %s22 = scalar_lea.sflag [#allocation4], 1
    %23 = vsyncpa %s22, 0
    loop: start=0, step=1, limit=4
    $region2: #{tpu_custom_call.1} parent=1 // loop_pre_header
      _
    $region3: #{tpu_custom_call.1} parent=1 // loop_header
      %s25 = sphi 0, %s29
      %p26 = scmp.ge.s32.totalorder %s25, 4
      %s35 = sphi 0, %s37
      %s38 = sphi 0, %s35
      %s39 = sphi 0, %s38
      %s55 = sphi 0, %s39
      %s59 = sphi 0, %s59
      %s61 = sphi 0, %s59
      %s62 = sphi 0, %s61
      %s76 = sphi 0, %s62
      %s80 = sphi 0, %s80
      %s82 = sphi 0, %s80
      %s83 = sphi 0, %s82
      %s97 = sphi 0, %s83
      %s101 = sphi 0, %s101
      %s103 = sphi 0, %s101
      %s104 = sphi 0, %s103
      %s118 = sphi 0, %s104
      %s122 = sphi 0, %s122
      %s124 = sphi 0, %s122
      %s125 = sphi 0, %s124
      %s139 = sphi 0, %s125
      %s143 = sphi 0, %s143
      %s145 = sphi 0, %s143
      %s146 = sphi 0, %s145
      %s160 = sphi 0, %s146
      %s164 = sphi 0, %s164
      %s166 = sphi 0, %s164
      %s167 = sphi 0, %s166
      %s181 = sphi 0, %s167
      %s185 = sphi 0, %s185
      %s187 = sphi 0, %s185
      %s188 = sphi 0, %s187
      %s202 = sphi 0, %s188
      %s206 = sphi 0, %s206
      %s208 = sphi 0, %s206
      %s209 = sphi 0, %s208
      %s223 = sphi 0, %s209
      %s229 = sphi 0, %s231
      %s232 = sphi 0, %s229
      %s233 = sphi 0, %s232
      %s249 = sphi 0, %s233
    $region4: #{tpu_custom_call.1} parent=1 // loop_header_branch
      %28 = sbr.rel (%p26) target = $region8
    $region5: #{tpu_custom_call.1} parent=1 // loop_body
      %s30 = ssub.s32 %s25, 1
      %s31 = ssub.s32 %s25, 2
      %s32 = sadd.s32 %s25, 1
      %s33 = ssub.s32 %s25, %s32
      %p34 = scmp.eq.s32.totalorder %s33, 0
      %s36 = sadd.s32 %s35, 1
      %s37 = scalar_select %p34, %s35, %s36
      %p40 = pneg %p34
      %p41 = scmp.eq.s32.totalorder %s25, 1
      %p42 = por %p40, %p41
      %p43 = scmp.ne.s32.totalorder %s35, %s38
      %p44 = scmp.eq.s32.totalorder %s25, 0
      %p45 = por %p43, %p44
      %p46 = scmp.ne.s32.totalorder %s35, %s38
      %p47 = scmp.eq.s32.totalorder %s30, 1
      %p48 = por %p46, %p47
      %p49 = scmp.ne.s32.totalorder %s38, %s39
      %p50 = scmp.eq.s32.totalorder %s30, 0
      %p51 = por %p49, %p50
      %p52 = scmp.ne.s32.totalorder %s38, %s39
      %p53 = scmp.eq.s32.totalorder %s31, 1
      %p54 = por %p52, %p53
      %p56 = scmp.ne.s32.totalorder %s39, %s55
      %p57 = scmp.eq.s32.totalorder %s31, 0
      %p58 = por %p56, %p57
      %s60 = sadd.s32 %s59, 1
      %p63 = scmp.eq.s32.totalorder %s25, 1
      %p64 = scmp.ne.s32.totalorder %s59, %s61
      %p65 = scmp.eq.s32.totalorder %s25, 0
      %p66 = por %p64, %p65
      %p67 = scmp.ne.s32.totalorder %s59, %s61
      %p68 = scmp.eq.s32.totalorder %s30, 1
      %p69 = por %p67, %p68
      %p70 = scmp.ne.s32.totalorder %s61, %s62
      %p71 = scmp.eq.s32.totalorder %s30, 0
      %p72 = por %p70, %p71
      %p73 = scmp.ne.s32.totalorder %s61, %s62
      %p74 = scmp.eq.s32.totalorder %s31, 1
      %p75 = por %p73, %p74
      %p77 = scmp.ne.s32.totalorder %s62, %s76
      %p78 = scmp.eq.s32.totalorder %s31, 0
      %p79 = por %p77, %p78
      %s81 = sadd.s32 %s80, 1
      %p84 = scmp.eq.s32.totalorder %s25, 1
      %p85 = scmp.ne.s32.totalorder %s80, %s82
      %p86 = scmp.eq.s32.totalorder %s25, 0
      %p87 = por %p85, %p86
      %p88 = scmp.ne.s32.totalorder %s80, %s82
      %p89 = scmp.eq.s32.totalorder %s30, 1
      %p90 = por %p88, %p89
      %p91 = scmp.ne.s32.totalorder %s82, %s83
      %p92 = scmp.eq.s32.totalorder %s30, 0
      %p93 = por %p91, %p92
      %p94 = scmp.ne.s32.totalorder %s82, %s83
      %p95 = scmp.eq.s32.totalorder %s31, 1
      %p96 = por %p94, %p95
      %p98 = scmp.ne.s32.totalorder %s83, %s97
      %p99 = scmp.eq.s32.totalorder %s31, 0
      %p100 = por %p98, %p99
      %s102 = sadd.s32 %s101, 1
      %p105 = scmp.eq.s32.totalorder %s25, 1
      %p106 = scmp.ne.s32.totalorder %s101, %s103
      %p107 = scmp.eq.s32.totalorder %s25, 0
      %p108 = por %p106, %p107
      %p109 = scmp.ne.s32.totalorder %s101, %s103
      %p110 = scmp.eq.s32.totalorder %s30, 1
      %p111 = por %p109, %p110
      %p112 = scmp.ne.s32.totalorder %s103, %s104
      %p113 = scmp.eq.s32.totalorder %s30, 0
      %p114 = por %p112, %p113
      %p115 = scmp.ne.s32.totalorder %s103, %s104
      %p116 = scmp.eq.s32.totalorder %s31, 1
      %p117 = por %p115, %p116
      %p119 = scmp.ne.s32.totalorder %s104, %s118
      %p120 = scmp.eq.s32.totalorder %s31, 0
      %p121 = por %p119, %p120
      %s123 = sadd.s32 %s122, 1
      %p126 = scmp.eq.s32.totalorder %s25, 1
      %p127 = scmp.ne.s32.totalorder %s122, %s124
      %p128 = scmp.eq.s32.totalorder %s25, 0
      %p129 = por %p127, %p128
      %p130 = scmp.ne.s32.totalorder %s122, %s124
      %p131 = scmp.eq.s32.totalorder %s30, 1
      %p132 = por %p130, %p131
      %p133 = scmp.ne.s32.totalorder %s124, %s125
      %p134 = scmp.eq.s32.totalorder %s30, 0
      %p135 = por %p133, %p134
      %p136 = scmp.ne.s32.totalorder %s124, %s125
      %p137 = scmp.eq.s32.totalorder %s31, 1
      %p138 = por %p136, %p137
      %p140 = scmp.ne.s32.totalorder %s125, %s139
      %p141 = scmp.eq.s32.totalorder %s31, 0
      %p142 = por %p140, %p141
      %s144 = sadd.s32 %s143, 1
      %p147 = scmp.eq.s32.totalorder %s25, 1
      %p148 = scmp.ne.s32.totalorder %s143, %s145
      %p149 = scmp.eq.s32.totalorder %s25, 0
      %p150 = por %p148, %p149
      %p151 = scmp.ne.s32.totalorder %s143, %s145
      %p152 = scmp.eq.s32.totalorder %s30, 1
      %p153 = por %p151, %p152
      %p154 = scmp.ne.s32.totalorder %s145, %s146
      %p155 = scmp.eq.s32.totalorder %s30, 0
      %p156 = por %p154, %p155
      %p157 = scmp.ne.s32.totalorder %s145, %s146
      %p158 = scmp.eq.s32.totalorder %s31, 1
      %p159 = por %p157, %p158
      %p161 = scmp.ne.s32.totalorder %s146, %s160
      %p162 = scmp.eq.s32.totalorder %s31, 0
      %p163 = por %p161, %p162
      %s165 = sadd.s32 %s164, 1
      %p168 = scmp.eq.s32.totalorder %s25, 1
      %p169 = scmp.ne.s32.totalorder %s164, %s166
      %p170 = scmp.eq.s32.totalorder %s25, 0
      %p171 = por %p169, %p170
      %p172 = scmp.ne.s32.totalorder %s164, %s166
      %p173 = scmp.eq.s32.totalorder %s30, 1
      %p174 = por %p172, %p173
      %p175 = scmp.ne.s32.totalorder %s166, %s167
      %p176 = scmp.eq.s32.totalorder %s30, 0
      %p177 = por %p175, %p176
      %p178 = scmp.ne.s32.totalorder %s166, %s167
      %p179 = scmp.eq.s32.totalorder %s31, 1
      %p180 = por %p178, %p179
      %p182 = scmp.ne.s32.totalorder %s167, %s181
      %p183 = scmp.eq.s32.totalorder %s31, 0
      %p184 = por %p182, %p183
      %s186 = sadd.s32 %s185, 1
      %p189 = scmp.eq.s32.totalorder %s25, 1
      %p190 = scmp.ne.s32.totalorder %s185, %s187
      %p191 = scmp.eq.s32.totalorder %s25, 0
      %p192 = por %p190, %p191
      %p193 = scmp.ne.s32.totalorder %s185, %s187
      %p194 = scmp.eq.s32.totalorder %s30, 1
      %p195 = por %p193, %p194
      %p196 = scmp.ne.s32.totalorder %s187, %s188
      %p197 = scmp.eq.s32.totalorder %s30, 0
      %p198 = por %p196, %p197
      %p199 = scmp.ne.s32.totalorder %s187, %s188
      %p200 = scmp.eq.s32.totalorder %s31, 1
      %p201 = por %p199, %p200
      %p203 = scmp.ne.s32.totalorder %s188, %s202
      %p204 = scmp.eq.s32.totalorder %s31, 0
      %p205 = por %p203, %p204
      %s207 = sadd.s32 %s206, 1
      %p210 = scmp.eq.s32.totalorder %s25, 1
      %p211 = scmp.ne.s32.totalorder %s206, %s208
      %p212 = scmp.eq.s32.totalorder %s25, 0
      %p213 = por %p211, %p212
      %p214 = scmp.ne.s32.totalorder %s206, %s208
      %p215 = scmp.eq.s32.totalorder %s30, 1
      %p216 = por %p214, %p215
      %p217 = scmp.ne.s32.totalorder %s208, %s209
      %p218 = scmp.eq.s32.totalorder %s30, 0
      %p219 = por %p217, %p218
      %p220 = scmp.ne.s32.totalorder %s208, %s209
      %p221 = scmp.eq.s32.totalorder %s31, 1
      %p222 = por %p220, %p221
      %p224 = scmp.ne.s32.totalorder %s209, %s223
      %p225 = scmp.eq.s32.totalorder %s31, 0
      %p226 = por %p224, %p225
      %s227 = ssub.s32 %s25, %s32
      %p228 = scmp.eq.s32.totalorder %s227, 0
      %s230 = sadd.s32 %s229, 1
      %s231 = scalar_select %p228, %s229, %s230
      %p234 = pneg %p228
      %p235 = scmp.eq.s32.totalorder %s25, 1
      %p236 = por %p234, %p235
      %p237 = scmp.ne.s32.totalorder %s229, %s232
      %p238 = scmp.eq.s32.totalorder %s25, 0
      %p239 = por %p237, %p238
      %p240 = scmp.ne.s32.totalorder %s229, %s232
      %p241 = scmp.eq.s32.totalorder %s30, 1
      %p242 = por %p240, %p241
      %p243 = scmp.ne.s32.totalorder %s232, %s233
      %p244 = scmp.eq.s32.totalorder %s30, 0
      %p245 = por %p243, %p244
      %p246 = scmp.ne.s32.totalorder %s232, %s233
      %p247 = scmp.eq.s32.totalorder %s31, 1
      %p248 = por %p246, %p247
      %p250 = scmp.ne.s32.totalorder %s233, %s249
      %p251 = scmp.eq.s32.totalorder %s31, 0
      %p252 = por %p250, %p251
      %p253 = scmp.le.s32.totalorder 1, %s25
      %p254 = scmp.lt.s32.totalorder %s25, 3
      %p255 = pnand %p253, %p254
      %p256 = pneg %p255
      // Predicated region
      $region9: #{tpu_custom_call.1} parent=5 // pred_check
        _
      $region10: #{tpu_custom_call.1} parent=5 // pred_check_branch
        %258 = sbr.rel (%p255) target = $region12
      $region11: #{tpu_custom_call.1} parent=5 // pred_region
        %s259 = ssub.s32 %s25, 1
        // Predicated region
        $region13: #{tpu_custom_call.1} parent=11 // pred_check
          %p260 = pneg %p72
        $region14: #{tpu_custom_call.1} parent=11 // pred_check_branch
          %262 = sbr.rel (%p260) target = $region16
        $region15: #{tpu_custom_call.1} parent=11 // pred_region
          %s264 = ssub.s32 4096, 4096
          %265 = vsyncadd [#allocation6], %s264
          %s266 = sshll.u32 [#allocation5], 4
          %s267 = int_to_ptr.vmem [resolvable:$true] %s266
          %272 = dma.hbm_to_vmem [thread:$0]  %s1, 4096, %s267, [#allocation6], 128, 128, 8
        $region16: #{tpu_custom_call.1} parent=11 // pred_fallthru
          _
        // Predicated region
        $region17: #{tpu_custom_call.1} parent=11 // pred_check
          %p273 = pneg %p93
        $region18: #{tpu_custom_call.1} parent=11 // pred_check_branch
          %275 = sbr.rel (%p273) target = $region20
        $region19: #{tpu_custom_call.1} parent=11 // pred_region
          %s277 = ssub.s32 16, 16
          %278 = vsyncadd [#allocation6], %s277
          %s280 = sshll.u32 [#allocation7], 4
          %s281 = int_to_ptr.vmem [resolvable:$true] %s280
          %283 = dma.hbm_to_vmem [thread:$0]  %s2, 16, %s281, [#allocation6]
        $region20: #{tpu_custom_call.1} parent=11 // pred_fallthru
          _
        // Predicated region
        $region21: #{tpu_custom_call.1} parent=11 // pred_check
          %p284 = pneg %p114
        $region22: #{tpu_custom_call.1} parent=11 // pred_check_branch
          %286 = sbr.rel (%p284) target = $region24
        $region23: #{tpu_custom_call.1} parent=11 // pred_region
          %s288 = ssub.s32 2048, 2048
          %289 = vsyncadd [#allocation9], %s288
          %s290 = sshll.u32 [#allocation8], 4
          %s291 = int_to_ptr.vmem [resolvable:$true] %s290
          %296 = dma.hbm_to_vmem [thread:$0]  %s3, 2048, %s291, [#allocation9], 128, 128, 8
        $region24: #{tpu_custom_call.1} parent=11 // pred_fallthru
          _
        // Predicated region
        $region25: #{tpu_custom_call.1} parent=11 // pred_check
          %p297 = pneg %p135
        $region26: #{tpu_custom_call.1} parent=11 // pred_check_branch
          %299 = sbr.rel (%p297) target = $region28
        $region27: #{tpu_custom_call.1} parent=11 // pred_region
          %s301 = ssub.s32 16, 16
          %302 = vsyncadd [#allocation9], %s301
          %s304 = sshll.u32 [#allocation10], 4
          %s305 = int_to_ptr.vmem [resolvable:$true] %s304
          %307 = dma.hbm_to_vmem [thread:$0]  %s4, 16, %s305, [#allocation9]
        $region28: #{tpu_custom_call.1} parent=11 // pred_fallthru
          _
        // Predicated region
        $region29: #{tpu_custom_call.1} parent=11 // pred_check
          %p308 = pneg %p156
        $region30: #{tpu_custom_call.1} parent=11 // pred_check_branch
          %310 = sbr.rel (%p308) target = $region32
        $region31: #{tpu_custom_call.1} parent=11 // pred_region
          %s312 = ssub.s32 2048, 2048
          %313 = vsyncadd [#allocation12], %s312
          %s314 = sshll.u32 [#allocation11], 4
          %s315 = int_to_ptr.vmem [resolvable:$true] %s314
          %320 = dma.hbm_to_vmem [thread:$0]  %s5, 2048, %s315, [#allocation12], 128, 128, 8
        $region32: #{tpu_custom_call.1} parent=11 // pred_fallthru
          _
        // Predicated region
        $region33: #{tpu_custom_call.1} parent=11 // pred_check
          %p321 = pneg %p177
        $region34: #{tpu_custom_call.1} parent=11 // pred_check_branch
          %323 = sbr.rel (%p321) target = $region36
        $region35: #{tpu_custom_call.1} parent=11 // pred_region
          %s325 = ssub.s32 16, 16
          %326 = vsyncadd [#allocation12], %s325
          %s328 = sshll.u32 [#allocation13], 4
          %s329 = int_to_ptr.vmem [resolvable:$true] %s328
          %331 = dma.hbm_to_vmem [thread:$0]  %s6, 16, %s329, [#allocation12]
        $region36: #{tpu_custom_call.1} parent=11 // pred_fallthru
          _
        // Predicated region
        $region37: #{tpu_custom_call.1} parent=11 // pred_check
          %p332 = pneg %p198
        $region38: #{tpu_custom_call.1} parent=11 // pred_check_branch
          %334 = sbr.rel (%p332) target = $region40
        $region39: #{tpu_custom_call.1} parent=11 // pred_region
          %s336 = ssub.s32 4096, 4096
          %337 = vsyncadd [#allocation15], %s336
          %s338 = sshll.u32 [#allocation14], 4
          %s339 = int_to_ptr.vmem [resolvable:$true] %s338
          %344 = dma.hbm_to_vmem [thread:$0]  %s7, 4096, %s339, [#allocation15], 256, 256, 16
        $region40: #{tpu_custom_call.1} parent=11 // pred_fallthru
          _
        // Predicated region
        $region41: #{tpu_custom_call.1} parent=11 // pred_check
          %p345 = pneg %p219
        $region42: #{tpu_custom_call.1} parent=11 // pred_check_branch
          %347 = sbr.rel (%p345) target = $region44
        $region43: #{tpu_custom_call.1} parent=11 // pred_region
          %s349 = ssub.s32 32, 32
          %350 = vsyncadd [#allocation15], %s349
          %s352 = sshll.u32 [#allocation16], 4
          %s353 = int_to_ptr.vmem [resolvable:$true] %s352
          %355 = dma.hbm_to_vmem [thread:$0]  %s8, 32, %s353, [#allocation15]
        $region44: #{tpu_custom_call.1} parent=11 // pred_fallthru
          _
      $region12: #{tpu_custom_call.1} parent=5 // pred_fallthru
        _
      %p356 = scmp.lt.s32.totalorder %s25, 2
      // Predicated region
      $region45: #{tpu_custom_call.1} parent=5 // pred_check
        %p357 = pneg %p356
      $region46: #{tpu_custom_call.1} parent=5 // pred_check_branch
        %359 = sbr.rel (%p357) target = $region48
      $region47: #{tpu_custom_call.1} parent=5 // pred_region
        // Predicated region
        $region49: #{tpu_custom_call.1} parent=47 // pred_check
          %p360 = pneg %p45
        $region50: #{tpu_custom_call.1} parent=47 // pred_check_branch
          %362 = sbr.rel (%p360) target = $region52
        $region51: #{tpu_custom_call.1} parent=47 // pred_region
          %s363 = sand.u32 %s35, 1
          %s364 = scalar_lea.sflag [#allocation3], %s363
          %s365 = sand.u32 %s35, 1
          %s366 = smul.addr %s365, 128
          %s367 = scalar_lea.vmem [#allocation2], %s366
          %s368 = smul.u32 8, %s25
          %s370 = ssub.s32 2048, 2048
          %371 = vsyncadd %s364, %s370
          %s372 = smul.addr %s368, 2
          %s373 = smul.addr %s372, 128
          %s374 = scalar_lea.hbm %s0, %s373
          %s375 = sshll.u32 %s367, 4
          %s376 = int_to_ptr.vmem [resolvable:$true] %s375
          %381 = dma.hbm_to_vmem [thread:$0]  %s374, 2048, %s376, %s364, 256, 256, 16
        $region52: #{tpu_custom_call.1} parent=47 // pred_fallthru
          _
      $region48: #{tpu_custom_call.1} parent=5 // pred_fallthru
        _
      %p382 = scmp.le.s32.totalorder 1, %s25
      %p383 = scmp.lt.s32.totalorder %s25, 3
      %p384 = pnand %p382, %p383
      %p385 = pneg %p384
      // Predicated region
      $region53: #{tpu_custom_call.1} parent=5 // pred_check
        _
      $region54: #{tpu_custom_call.1} parent=5 // pred_check_branch
        %387 = sbr.rel (%p384) target = $region56
      $region55: #{tpu_custom_call.1} parent=5 // pred_region
        %s388 = ssub.s32 %s25, 1
        %s389 = sand.u32 %s38, 1
        %s390 = scalar_lea.sflag [#allocation3], %s389
        %s391 = sand.u32 %s38, 1
        %s392 = smul.addr %s391, 128
        %s393 = scalar_lea.vmem [#allocation2], %s392
        // Predicated region
        $region57: #{tpu_custom_call.1} parent=55 // pred_check
          %p394 = pneg %p51
        $region58: #{tpu_custom_call.1} parent=55 // pred_check_branch
          %396 = sbr.rel (%p394) target = $region60
        $region59: #{tpu_custom_call.1} parent=55 // pred_region
          %397 = dma.done %s390, 2048
        $region60: #{tpu_custom_call.1} parent=55 // pred_fallthru
          _
        // Predicated region
        $region61: #{tpu_custom_call.1} parent=55 // pred_check
          %p398 = pneg %p72
        $region62: #{tpu_custom_call.1} parent=55 // pred_check_branch
          %400 = sbr.rel (%p398) target = $region64
        $region63: #{tpu_custom_call.1} parent=55 // pred_region
          %401 = dma.done [#allocation6], 4096
        $region64: #{tpu_custom_call.1} parent=55 // pred_fallthru
          _
        // Predicated region
        $region65: #{tpu_custom_call.1} parent=55 // pred_check
          %p402 = pneg %p93
        $region66: #{tpu_custom_call.1} parent=55 // pred_check_branch
          %404 = sbr.rel (%p402) target = $region68
        $region67: #{tpu_custom_call.1} parent=55 // pred_region
          %405 = dma.done [#allocation6], 16
        $region68: #{tpu_custom_call.1} parent=55 // pred_fallthru
          _
        // Predicated region
        $region69: #{tpu_custom_call.1} parent=55 // pred_check
          %p406 = pneg %p114
        $region70: #{tpu_custom_call.1} parent=55 // pred_check_branch
          %408 = sbr.rel (%p406) target = $region72
        $region71: #{tpu_custom_call.1} parent=55 // pred_region
          %409 = dma.done [#allocation9], 2048
        $region72: #{tpu_custom_call.1} parent=55 // pred_fallthru
          _
        // Predicated region
        $region73: #{tpu_custom_call.1} parent=55 // pred_check
          %p410 = pneg %p135
        $region74: #{tpu_custom_call.1} parent=55 // pred_check_branch
          %412 = sbr.rel (%p410) target = $region76
        $region75: #{tpu_custom_call.1} parent=55 // pred_region
          %413 = dma.done [#allocation9], 16
        $region76: #{tpu_custom_call.1} parent=55 // pred_fallthru
          _
        // Predicated region
        $region77: #{tpu_custom_call.1} parent=55 // pred_check
          %p414 = pneg %p156
        $region78: #{tpu_custom_call.1} parent=55 // pred_check_branch
          %416 = sbr.rel (%p414) target = $region80
        $region79: #{tpu_custom_call.1} parent=55 // pred_region
          %417 = dma.done [#allocation12], 2048
        $region80: #{tpu_custom_call.1} parent=55 // pred_fallthru
          _
        // Predicated region
        $region81: #{tpu_custom_call.1} parent=55 // pred_check
          %p418 = pneg %p177
        $region82: #{tpu_custom_call.1} parent=55 // pred_check_branch
          %420 = sbr.rel (%p418) target = $region84
        $region83: #{tpu_custom_call.1} parent=55 // pred_region
          %421 = dma.done [#allocation12], 16
        $region84: #{tpu_custom_call.1} parent=55 // pred_fallthru
          _
        // Predicated region
        $region85: #{tpu_custom_call.1} parent=55 // pred_check
          %p422 = pneg %p198
        $region86: #{tpu_custom_call.1} parent=55 // pred_check_branch
          %424 = sbr.rel (%p422) target = $region88
        $region87: #{tpu_custom_call.1} parent=55 // pred_region
          %425 = dma.done [#allocation15], 4096
        $region88: #{tpu_custom_call.1} parent=55 // pred_fallthru
          _
        // Predicated region
        $region89: #{tpu_custom_call.1} parent=55 // pred_check
          %p426 = pneg %p219
        $region90: #{tpu_custom_call.1} parent=55 // pred_check_branch
          %428 = sbr.rel (%p426) target = $region92
        $region91: #{tpu_custom_call.1} parent=55 // pred_region
          %429 = dma.done [#allocation15], 32
        $region92: #{tpu_custom_call.1} parent=55 // pred_fallthru
          _
        %s430 = sand.u32 %s38, 1
        %s431 = scalar_lea.sflag [#allocation3], %s430
        %s432 = sand.u32 %s38, 1
        %s433 = smul.addr %s432, 128
        %s434 = scalar_lea.vmem [#allocation2], %s433
        %p435 = pneg %p51
        %p436 = pneg %p48
        %p437 = pneg %p72
        %p438 = pneg %p69
        %p439 = pneg %p93
        %p440 = pneg %p90
        %p441 = pneg %p114
        %p442 = pneg %p111
        %p443 = pneg %p135
        %p444 = pneg %p132
        %p445 = pneg %p156
        %p446 = pneg %p153
        %p447 = pneg %p177
        %p448 = pneg %p174
        %p449 = pneg %p198
        %p450 = pneg %p195
        %p451 = pneg %p219
        %p452 = pneg %p216
        %p453 = pneg %p245
        %p454 = pneg %p242
        %s455 = sand.u32 %s232, 1
        %s456 = scalar_lea.sflag [#allocation4], %s455
        %s457 = sand.u32 %s232, 1
        %s458 = smul.addr %s457, 128
        %s459 = scalar_lea.vmem [#allocation17], %s458
        %s460 = smul.u32 8, %s30
        %s461 = smul.u32 8, %s30
        %v462 = vld [vmem:[%s393] sm:$0xff]
        %v463 = vld [vmem:[%s393 + $0x8] sm:$0xff]
        %v464 = vld [vmem:[%s393 + $0x10] sm:$0xff]
        %v465 = vld [vmem:[%s393 + $0x18] sm:$0xff]
        %v466 = vld [vmem:[%s393 + $0x20] sm:$0xff]
        %v467 = vld [vmem:[%s393 + $0x28] sm:$0xff]
        %v468 = vld [vmem:[%s393 + $0x30] sm:$0xff]
        %v469 = vld [vmem:[%s393 + $0x38] sm:$0xff]
        %v470 = vld [vmem:[%s393 + $0x40] sm:$0xff]
        %v471 = vld [vmem:[%s393 + $0x48] sm:$0xff]
        %v472 = vld [vmem:[%s393 + $0x50] sm:$0xff]
        %v473 = vld [vmem:[%s393 + $0x58] sm:$0xff]
        %v474 = vld [vmem:[%s393 + $0x60] sm:$0xff]
        %v475 = vld [vmem:[%s393 + $0x68] sm:$0xff]
        %v476 = vld [vmem:[%s393 + $0x70] sm:$0xff]
        %v477 = vld [vmem:[%s393 + $0x78] sm:$0xff]
        %v478 = vld [vmem:[#allocation5] sm:$0xff]
        %v479 = vld [vmem:[#allocation5 + $0x8] sm:$0xff]
        %v480 = vld [vmem:[#allocation5 + $0x10] sm:$0xff]
        %v481 = vld [vmem:[#allocation5 + $0x18] sm:$0xff]
        %v482 = vld [vmem:[#allocation5 + $0x20] sm:$0xff]
        %v483 = vld [vmem:[#allocation5 + $0x28] sm:$0xff]
        %v484 = vld [vmem:[#allocation5 + $0x30] sm:$0xff]
        %v485 = vld [vmem:[#allocation5 + $0x38] sm:$0xff]
        %v486 = vld [vmem:[#allocation5 + $0x40] sm:$0xff]
        %v487 = vld [vmem:[#allocation5 + $0x48] sm:$0xff]
        %v488 = vld [vmem:[#allocation5 + $0x50] sm:$0xff]
        %v489 = vld [vmem:[#allocation5 + $0x58] sm:$0xff]
        %v490 = vld [vmem:[#allocation5 + $0x60] sm:$0xff]
        %v491 = vld [vmem:[#allocation5 + $0x68] sm:$0xff]
        %v492 = vld [vmem:[#allocation5 + $0x70] sm:$0xff]
        %v493 = vld [vmem:[#allocation5 + $0x78] sm:$0xff]
        %v494 = vld [vmem:[#allocation5 + $0x80] sm:$0xff]
        %v495 = vld [vmem:[#allocation5 + $0x88] sm:$0xff]
        %v496 = vld [vmem:[#allocation5 + $0x90] sm:$0xff]
        %v497 = vld [vmem:[#allocation5 + $0x98] sm:$0xff]
        %v498 = vld [vmem:[#allocation5 + $0xa0] sm:$0xff]
        %v499 = vld [vmem:[#allocation5 + $0xa8] sm:$0xff]
        %v500 = vld [vmem:[#allocation5 + $0xb0] sm:$0xff]
        %v501 = vld [vmem:[#allocation5 + $0xb8] sm:$0xff]
        %v502 = vld [vmem:[#allocation5 + $0xc0] sm:$0xff]
        %v503 = vld [vmem:[#allocation5 + $0xc8] sm:$0xff]
        %v504 = vld [vmem:[#allocation5 + $0xd0] sm:$0xff]
        %v505 = vld [vmem:[#allocation5 + $0xd8] sm:$0xff]
        %v506 = vld [vmem:[#allocation5 + $0xe0] sm:$0xff]
        %v507 = vld [vmem:[#allocation5 + $0xe8] sm:$0xff]
        %v508 = vld [vmem:[#allocation5 + $0xf0] sm:$0xff]
        %v509 = vld [vmem:[#allocation5 + $0xf8] sm:$0xff]
        %v510 = vld [vmem:[#allocation7] sm:$0x1]
        %v512 = vlaneseq
        %v513 = vshrl.u32 %v512, 7
        %v514 = vsub.s32 0, %v513
        %v515 = vrot.slane %v510, %v514
        %517 = vmatprep.subr.mxu0 0.0
        %518 = vmatpush1.msra.mxu0 %v478
        %519 = vmatprep.subr.mxu0 0.0
        %520 = vmatpush1.msra.mxu0 %v479
        %521 = vmatprep.subr.mxu0 0.0
        %522 = vmatpush1.msra.mxu0 %v480
        %523 = vmatprep.subr.mxu0 0.0
        %524 = vmatpush1.msra.mxu0 %v481
        %525 = vmatprep.subr.mxu0 0.0
        %526 = vmatpush1.msra.mxu0 %v482
        %527 = vmatprep.subr.mxu0 0.0
        %528 = vmatpush1.msra.mxu0 %v483
        %529 = vmatprep.subr.mxu0 0.0
        %530 = vmatpush1.msra.mxu0 %v484
        %531 = vmatprep.subr.mxu0 0.0
        %532 = vmatpush1.msra.mxu0 %v485
        %533 = vmatprep.subr.mxu0 0.0
        %534 = vmatpush1.msra.mxu0 %v486
        %535 = vmatprep.subr.mxu0 0.0
        %536 = vmatpush1.msra.mxu0 %v487
        %537 = vmatprep.subr.mxu0 0.0
        %538 = vmatpush1.msra.mxu0 %v488
        %539 = vmatprep.subr.mxu0 0.0
        %540 = vmatpush1.msra.mxu0 %v489
        %541 = vmatprep.subr.mxu0 0.0
        %542 = vmatpush1.msra.mxu0 %v490
        %543 = vmatprep.subr.mxu0 0.0
        %544 = vmatpush1.msra.mxu0 %v491
        %545 = vmatprep.subr.mxu0 0.0
        %546 = vmatpush1.msra.mxu0 %v492
        %547 = vmatprep.subr.mxu0 0.0
        %548 = vmatpush1.msra.mxu0 %v493
        %549 = vmatprep.subr.mxu0 0.0
        %550 = vmatpush1.msra.mxu0 %v494
        %551 = vmatprep.subr.mxu0 0.0
        %552 = vmatpush1.msra.mxu0 %v495
        %553 = vmatprep.subr.mxu0 0.0
        %554 = vmatpush1.msra.mxu0 %v496
        %555 = vmatprep.subr.mxu0 0.0
        %556 = vmatpush1.msra.mxu0 %v497
        %557 = vmatprep.subr.mxu0 0.0
        %558 = vmatpush1.msra.mxu0 %v498
        %559 = vmatprep.subr.mxu0 0.0
        %560 = vmatpush1.msra.mxu0 %v499
        %561 = vmatprep.subr.mxu0 0.0
        %562 = vmatpush1.msra.mxu0 %v500
        %563 = vmatprep.subr.mxu0 0.0
        %564 = vmatpush1.msra.mxu0 %v501
        %565 = vmatprep.subr.mxu0 0.0
        %566 = vmatpush1.msra.mxu0 %v502
        %567 = vmatprep.subr.mxu0 0.0
        %568 = vmatpush1.msra.mxu0 %v503
        %569 = vmatprep.subr.mxu0 0.0
        %570 = vmatpush1.msra.mxu0 %v504
        %571 = vmatprep.subr.mxu0 0.0
        %572 = vmatpush1.msra.mxu0 %v505
        %573 = vmatprep.subr.mxu0 0.0
        %574 = vmatpush1.msra.mxu0 %v506
        %575 = vmatprep.subr.mxu0 0.0
        %576 = vmatpush1.msra.mxu0 %v507
        %577 = vmatprep.subr.mxu0 0.0
        %578 = vmatpush1.msra.mxu0 %v508
        %579 = vmatprep.subr.mxu0 0.0
        %580 = vmatpush1.msra.mxu0 %v509
        %581 = vmatprep.mubr.f32.mxu0 %v463
        %582 = vmatmul.mubr.f32.gmra.mrb[0].mxu0 %v462
        %v583 = vpop.f32.mrb[0].mxu0
        %v584 = vadd.f32 %v515, %v583
        %v585 = vpop.f32.mrb[0].mxu0
        %586 = vmatprep.mubr.f32.mxu0 %v465
        %587 = vmatmul.mubr.f32.gmra.mrb[0].mxu0 %v464
        %v588 = vpop.f32.mrb[0].mxu0
        %v589 = vadd.f32 %v515, %v588
        %v590 = vpop.f32.mrb[0].mxu0
        %591 = vmatprep.mubr.f32.mxu0 %v467
        %592 = vmatmul.mubr.f32.gmra.mrb[0].mxu0 %v466
        %v593 = vpop.f32.mrb[0].mxu0
        %v594 = vadd.f32 %v515, %v593
        %v595 = vpop.f32.mrb[0].mxu0
        %596 = vmatprep.mubr.f32.mxu0 %v469
        %597 = vmatmul.mubr.f32.gmra.mrb[0].mxu0 %v468
        %v598 = vpop.f32.mrb[0].mxu0
        %v599 = vadd.f32 %v515, %v598
        %v600 = vpop.f32.mrb[0].mxu0
        %601 = vmatprep.mubr.f32.mxu0 %v471
        %602 = vmatmul.mubr.f32.gmra.mrb[0].mxu0 %v470
        %v603 = vpop.f32.mrb[0].mxu0
        %v604 = vadd.f32 %v515, %v603
        %v605 = vpop.f32.mrb[0].mxu0
        %606 = vmatprep.mubr.f32.mxu0 %v473
        %607 = vmatmul.mubr.f32.gmra.mrb[0].mxu0 %v472
        %v608 = vpop.f32.mrb[0].mxu0
        %v609 = vadd.f32 %v515, %v608
        %v610 = vpop.f32.mrb[0].mxu0
        %611 = vmatprep.mubr.f32.mxu0 %v475
        %612 = vmatmul.mubr.f32.gmra.mrb[0].mxu0 %v474
        %v613 = vpop.f32.mrb[0].mxu0
        %v614 = vadd.f32 %v515, %v613
        %v615 = vpop.f32.mrb[0].mxu0
        %616 = vmatprep.mubr.f32.mxu0 %v477
        %617 = vmatmul.mubr.f32.gmra.mrb[0].mxu0 %v476
        %v618 = vpop.f32.mrb[0].mxu0
        %v619 = vadd.f32 %v515, %v618
        %v620 = vpop.f32.mrb[0].mxu0
        %621 = vdwg.mxu0
        %v622 = vxor.u32 %v584, 2147483648
        %v623 = vxor.u32 %v589, 2147483648
        %v624 = vxor.u32 %v594, 2147483648
        %v625 = vxor.u32 %v599, 2147483648
        %v626 = vxor.u32 %v604, 2147483648
        %v627 = vxor.u32 %v609, 2147483648
        %v628 = vxor.u32 %v614, 2147483648
        %v629 = vxor.u32 %v619, 2147483648
        %v630 = vmul.f32 %v622, 1.442695
        %v631 = vpow.pop %v630
        %v632 = vmul.f32 %v623, 1.442695
        %v633 = vpow.pop %v632
        %v634 = vmul.f32 %v624, 1.442695
        %v635 = vpow.pop %v634
        %v636 = vmul.f32 %v625, 1.442695
        %v637 = vpow.pop %v636
        %v638 = vmul.f32 %v626, 1.442695
        %v639 = vpow.pop %v638
        %v640 = vmul.f32 %v627, 1.442695
        %v641 = vpow.pop %v640
        %v642 = vmul.f32 %v628, 1.442695
        %v643 = vpow.pop %v642
        %v644 = vmul.f32 %v629, 1.442695
        %v645 = vpow.pop %v644
        %v646 = vadd.f32 %v631, 1.0
        %v647 = vadd.f32 %v633, 1.0
        %v648 = vadd.f32 %v635, 1.0
        %v649 = vadd.f32 %v637, 1.0
        %v650 = vadd.f32 %v639, 1.0
        %v651 = vadd.f32 %v641, 1.0
        %v652 = vadd.f32 %v643, 1.0
        %v653 = vadd.f32 %v645, 1.0
        %v654 = vrcp.pop %v646
        %v655 = vmul.f32 1.0, %v654
        %v656 = vrcp.pop %v647
        %v657 = vmul.f32 1.0, %v656
        %v658 = vrcp.pop %v648
        %v659 = vmul.f32 1.0, %v658
        %v660 = vrcp.pop %v649
        %v661 = vmul.f32 1.0, %v660
        %v662 = vrcp.pop %v650
        %v663 = vmul.f32 1.0, %v662
        %v664 = vrcp.pop %v651
        %v665 = vmul.f32 1.0, %v664
        %v666 = vrcp.pop %v652
        %v667 = vmul.f32 1.0, %v666
        %v668 = vrcp.pop %v653
        %v669 = vmul.f32 1.0, %v668
        %v670 = vld [vmem:[#allocation8] sm:$0xff]
        %v671 = vld [vmem:[#allocation8 + $0x8] sm:$0xff]
        %v672 = vld [vmem:[#allocation8 + $0x10] sm:$0xff]
        %v673 = vld [vmem:[#allocation8 + $0x18] sm:$0xff]
        %v674 = vld [vmem:[#allocation8 + $0x20] sm:$0xff]
        %v675 = vld [vmem:[#allocation8 + $0x28] sm:$0xff]
        %v676 = vld [vmem:[#allocation8 + $0x30] sm:$0xff]
        %v677 = vld [vmem:[#allocation8 + $0x38] sm:$0xff]
        %v678 = vld [vmem:[#allocation8 + $0x40] sm:$0xff]
        %v679 = vld [vmem:[#allocation8 + $0x48] sm:$0xff]
        %v680 = vld [vmem:[#allocation8 + $0x50] sm:$0xff]
        %v681 = vld [vmem:[#allocation8 + $0x58] sm:$0xff]
        %v682 = vld [vmem:[#allocation8 + $0x60] sm:$0xff]
        %v683 = vld [vmem:[#allocation8 + $0x68] sm:$0xff]
        %v684 = vld [vmem:[#allocation8 + $0x70] sm:$0xff]
        %v685 = vld [vmem:[#allocation8 + $0x78] sm:$0xff]
        %v686 = vld [vmem:[#allocation10] sm:$0x1]
        %v688 = vlaneseq
        %v689 = vshrl.u32 %v688, 7
        %v690 = vsub.s32 0, %v689
        %v691 = vrot.slane %v686, %v690
        %693 = vmatprep.subr.mxu0 0.0
        %694 = vmatpush1.msra.mxu0 %v670
        %695 = vmatprep.subr.mxu0 0.0
        %696 = vmatpush1.msra.mxu0 %v671
        %697 = vmatprep.subr.mxu0 0.0
        %698 = vmatpush1.msra.mxu0 %v672
        %699 = vmatprep.subr.mxu0 0.0
        %700 = vmatpush1.msra.mxu0 %v673
        %701 = vmatprep.subr.mxu0 0.0
        %702 = vmatpush1.msra.mxu0 %v674
        %703 = vmatprep.subr.mxu0 0.0
        %704 = vmatpush1.msra.mxu0 %v675
        %705 = vmatprep.subr.mxu0 0.0
        %706 = vmatpush1.msra.mxu0 %v676
        %707 = vmatprep.subr.mxu0 0.0
        %708 = vmatpush1.msra.mxu0 %v677
        %709 = vmatprep.subr.mxu0 0.0
        %710 = vmatpush1.msra.mxu0 %v678
        %711 = vmatprep.subr.mxu0 0.0
        %712 = vmatpush1.msra.mxu0 %v679
        %713 = vmatprep.subr.mxu0 0.0
        %714 = vmatpush1.msra.mxu0 %v680
        %715 = vmatprep.subr.mxu0 0.0
        %716 = vmatpush1.msra.mxu0 %v681
        %717 = vmatprep.subr.mxu0 0.0
        %718 = vmatpush1.msra.mxu0 %v682
        %719 = vmatprep.subr.mxu0 0.0
        %720 = vmatpush1.msra.mxu0 %v683
        %721 = vmatprep.subr.mxu0 0.0
        %722 = vmatpush1.msra.mxu0 %v684
        %723 = vmatprep.subr.mxu0 0.0
        %724 = vmatpush1.msra.mxu0 %v685
        %725 = vmatprep.subr.mxu0 0.0
        %726 = vmatpush1.msra.mxu0 0.0
        %727 = vmatprep.subr.mxu0 0.0
        %728 = vmatpush1.msra.mxu0 0.0
        %729 = vmatprep.subr.mxu0 0.0
        %730 = vmatpush1.msra.mxu0 0.0
        %731 = vmatprep.subr.mxu0 0.0
        %732 = vmatpush1.msra.mxu0 0.0
        %733 = vmatprep.subr.mxu0 0.0
        %734 = vmatpush1.msra.mxu0 0.0
        %735 = vmatprep.subr.mxu0 0.0
        %736 = vmatpush1.msra.mxu0 0.0
        %737 = vmatprep.subr.mxu0 0.0
        %738 = vmatpush1.msra.mxu0 0.0
        %739 = vmatprep.subr.mxu0 0.0
        %740 = vmatpush1.msra.mxu0 0.0
        %741 = vmatprep.subr.mxu0 0.0
        %742 = vmatpush1.msra.mxu0 0.0
        %743 = vmatprep.subr.mxu0 0.0
        %744 = vmatpush1.msra.mxu0 0.0
        %745 = vmatprep.subr.mxu0 0.0
        %746 = vmatpush1.msra.mxu0 0.0
        %747 = vmatprep.subr.mxu0 0.0
        %748 = vmatpush1.msra.mxu0 0.0
        %749 = vmatprep.subr.mxu0 0.0
        %750 = vmatpush1.msra.mxu0 0.0
        %751 = vmatprep.subr.mxu0 0.0
        %752 = vmatpush1.msra.mxu0 0.0
        %753 = vmatprep.subr.mxu0 0.0
        %754 = vmatpush1.msra.mxu0 0.0
        %755 = vmatprep.subr.mxu0 0.0
        %756 = vmatpush1.msra.mxu0 0.0
        %757 = vmatprep.mubr.f32.mxu0 0.0
        %758 = vmatmul.mubr.f32.gmra.mrb[0].mxu0 %v655
        %v759 = vpop.f32.mrb[0].mxu0
        %v760 = vadd.f32 %v691, %v759
        %v761 = vpop.f32.mrb[0].mxu0
        %762 = vmatprep.mubr.f32.mxu0 0.0
        %763 = vmatmul.mubr.f32.gmra.mrb[0].mxu0 %v657
        %v764 = vpop.f32.mrb[0].mxu0
        %v765 = vadd.f32 %v691, %v764
        %v766 = vpop.f32.mrb[0].mxu0
        %767 = vmatprep.mubr.f32.mxu0 0.0
        %768 = vmatmul.mubr.f32.gmra.mrb[0].mxu0 %v659
        %v769 = vpop.f32.mrb[0].mxu0
        %v770 = vadd.f32 %v691, %v769
        %v771 = vpop.f32.mrb[0].mxu0
        %772 = vmatprep.mubr.f32.mxu0 0.0
        %773 = vmatmul.mubr.f32.gmra.mrb[0].mxu0 %v661
        %v774 = vpop.f32.mrb[0].mxu0
        %v775 = vadd.f32 %v691, %v774
        %v776 = vpop.f32.mrb[0].mxu0
        %777 = vmatprep.mubr.f32.mxu0 0.0
        %778 = vmatmul.mubr.f32.gmra.mrb[0].mxu0 %v663
        %v779 = vpop.f32.mrb[0].mxu0
        %v780 = vadd.f32 %v691, %v779
        %v781 = vpop.f32.mrb[0].mxu0
        %782 = vmatprep.mubr.f32.mxu0 0.0
        %783 = vmatmul.mubr.f32.gmra.mrb[0].mxu0 %v665
        %v784 = vpop.f32.mrb[0].mxu0
        %v785 = vadd.f32 %v691, %v784
        %v786 = vpop.f32.mrb[0].mxu0
        %787 = vmatprep.mubr.f32.mxu0 0.0
        %788 = vmatmul.mubr.f32.gmra.mrb[0].mxu0 %v667
        %v789 = vpop.f32.mrb[0].mxu0
        %v790 = vadd.f32 %v691, %v789
        %v791 = vpop.f32.mrb[0].mxu0
        %792 = vmatprep.mubr.f32.mxu0 0.0
        %793 = vmatmul.mubr.f32.gmra.mrb[0].mxu0 %v669
        %v794 = vpop.f32.mrb[0].mxu0
        %v795 = vadd.f32 %v691, %v794
        %v796 = vpop.f32.mrb[0].mxu0
        %797 = vdwg.mxu0
        %v798 = vxor.u32 %v760, 2147483648
        %v799 = vxor.u32 %v765, 2147483648
        %v800 = vxor.u32 %v770, 2147483648
        %v801 = vxor.u32 %v775, 2147483648
        %v802 = vxor.u32 %v780, 2147483648
        %v803 = vxor.u32 %v785, 2147483648
        %v804 = vxor.u32 %v790, 2147483648
        %v805 = vxor.u32 %v795, 2147483648
        %v806 = vmul.f32 %v798, 1.442695
        %v807 = vpow.pop %v806
        %v808 = vmul.f32 %v799, 1.442695
        %v809 = vpow.pop %v808
        %v810 = vmul.f32 %v800, 1.442695
        %v811 = vpow.pop %v810
        %v812 = vmul.f32 %v801, 1.442695
        %v813 = vpow.pop %v812
        %v814 = vmul.f32 %v802, 1.442695
        %v815 = vpow.pop %v814
        %v816 = vmul.f32 %v803, 1.442695
        %v817 = vpow.pop %v816
        %v818 = vmul.f32 %v804, 1.442695
        %v819 = vpow.pop %v818
        %v820 = vmul.f32 %v805, 1.442695
        %v821 = vpow.pop %v820
        %v822 = vadd.f32 %v807, 1.0
        %v823 = vadd.f32 %v809, 1.0
        %v824 = vadd.f32 %v811, 1.0
        %v825 = vadd.f32 %v813, 1.0
        %v826 = vadd.f32 %v815, 1.0
        %v827 = vadd.f32 %v817, 1.0
        %v828 = vadd.f32 %v819, 1.0
        %v829 = vadd.f32 %v821, 1.0
        %v830 = vrcp.pop %v822
        %v831 = vmul.f32 1.0, %v830
        %v832 = vrcp.pop %v823
        %v833 = vmul.f32 1.0, %v832
        %v834 = vrcp.pop %v824
        %v835 = vmul.f32 1.0, %v834
        %v836 = vrcp.pop %v825
        %v837 = vmul.f32 1.0, %v836
        %v838 = vrcp.pop %v826
        %v839 = vmul.f32 1.0, %v838
        %v840 = vrcp.pop %v827
        %v841 = vmul.f32 1.0, %v840
        %v842 = vrcp.pop %v828
        %v843 = vmul.f32 1.0, %v842
        %v844 = vrcp.pop %v829
        %v845 = vmul.f32 1.0, %v844
        %v846 = vld [vmem:[#allocation11] sm:$0xff]
        %v847 = vld [vmem:[#allocation11 + $0x8] sm:$0xff]
        %v848 = vld [vmem:[#allocation11 + $0x10] sm:$0xff]
        %v849 = vld [vmem:[#allocation11 + $0x18] sm:$0xff]
        %v850 = vld [vmem:[#allocation11 + $0x20] sm:$0xff]
        %v851 = vld [vmem:[#allocation11 + $0x28] sm:$0xff]
        %v852 = vld [vmem:[#allocation11 + $0x30] sm:$0xff]
        %v853 = vld [vmem:[#allocation11 + $0x38] sm:$0xff]
        %v854 = vld [vmem:[#allocation11 + $0x40] sm:$0xff]
        %v855 = vld [vmem:[#allocation11 + $0x48] sm:$0xff]
        %v856 = vld [vmem:[#allocation11 + $0x50] sm:$0xff]
        %v857 = vld [vmem:[#allocation11 + $0x58] sm:$0xff]
        %v858 = vld [vmem:[#allocation11 + $0x60] sm:$0xff]
        %v859 = vld [vmem:[#allocation11 + $0x68] sm:$0xff]
        %v860 = vld [vmem:[#allocation11 + $0x70] sm:$0xff]
        %v861 = vld [vmem:[#allocation11 + $0x78] sm:$0xff]
        %v862 = vld [vmem:[#allocation13] sm:$0x1]
        %v864 = vlaneseq
        %v865 = vshrl.u32 %v864, 7
        %v866 = vsub.s32 0, %v865
        %v867 = vrot.slane %v862, %v866
        %869 = vmatprep.subr.mxu0 0.0
        %870 = vmatpush1.msra.mxu0 %v846
        %871 = vmatprep.subr.mxu0 0.0
        %872 = vmatpush1.msra.mxu0 %v847
        %873 = vmatprep.subr.mxu0 0.0
        %874 = vmatpush1.msra.mxu0 %v848
        %875 = vmatprep.subr.mxu0 0.0
        %876 = vmatpush1.msra.mxu0 %v849
        %877 = vmatprep.subr.mxu0 0.0
        %878 = vmatpush1.msra.mxu0 %v850
        %879 = vmatprep.subr.mxu0 0.0
        %880 = vmatpush1.msra.mxu0 %v851
        %881 = vmatprep.subr.mxu0 0.0
        %882 = vmatpush1.msra.mxu0 %v852
        %883 = vmatprep.subr.mxu0 0.0
        %884 = vmatpush1.msra.mxu0 %v853
        %885 = vmatprep.subr.mxu0 0.0
        %886 = vmatpush1.msra.mxu0 %v854
        %887 = vmatprep.subr.mxu0 0.0
        %888 = vmatpush1.msra.mxu0 %v855
        %889 = vmatprep.subr.mxu0 0.0
        %890 = vmatpush1.msra.mxu0 %v856
        %891 = vmatprep.subr.mxu0 0.0
        %892 = vmatpush1.msra.mxu0 %v857
        %893 = vmatprep.subr.mxu0 0.0
        %894 = vmatpush1.msra.mxu0 %v858
        %895 = vmatprep.subr.mxu0 0.0
        %896 = vmatpush1.msra.mxu0 %v859
        %897 = vmatprep.subr.mxu0 0.0
        %898 = vmatpush1.msra.mxu0 %v860
        %899 = vmatprep.subr.mxu0 0.0
        %900 = vmatpush1.msra.mxu0 %v861
        %901 = vmatprep.subr.mxu0 0.0
        %902 = vmatpush1.msra.mxu0 0.0
        %903 = vmatprep.subr.mxu0 0.0
        %904 = vmatpush1.msra.mxu0 0.0
        %905 = vmatprep.subr.mxu0 0.0
        %906 = vmatpush1.msra.mxu0 0.0
        %907 = vmatprep.subr.mxu0 0.0
        %908 = vmatpush1.msra.mxu0 0.0
        %909 = vmatprep.subr.mxu0 0.0
        %910 = vmatpush1.msra.mxu0 0.0
        %911 = vmatprep.subr.mxu0 0.0
        %912 = vmatpush1.msra.mxu0 0.0
        %913 = vmatprep.subr.mxu0 0.0
        %914 = vmatpush1.msra.mxu0 0.0
        %915 = vmatprep.subr.mxu0 0.0
        %916 = vmatpush1.msra.mxu0 0.0
        %917 = vmatprep.subr.mxu0 0.0
        %918 = vmatpush1.msra.mxu0 0.0
        %919 = vmatprep.subr.mxu0 0.0
        %920 = vmatpush1.msra.mxu0 0.0
        %921 = vmatprep.subr.mxu0 0.0
        %922 = vmatpush1.msra.mxu0 0.0
        %923 = vmatprep.subr.mxu0 0.0
        %924 = vmatpush1.msra.mxu0 0.0
        %925 = vmatprep.subr.mxu0 0.0
        %926 = vmatpush1.msra.mxu0 0.0
        %927 = vmatprep.subr.mxu0 0.0
        %928 = vmatpush1.msra.mxu0 0.0
        %929 = vmatprep.subr.mxu0 0.0
        %930 = vmatpush1.msra.mxu0 0.0
        %931 = vmatprep.subr.mxu0 0.0
        %932 = vmatpush1.msra.mxu0 0.0
        %933 = vmatprep.mubr.f32.mxu0 0.0
        %934 = vmatmul.mubr.f32.gmra.mrb[0].mxu0 %v831
        %v935 = vpop.f32.mrb[0].mxu0
        %v936 = vadd.f32 %v867, %v935
        %v937 = vpop.f32.mrb[0].mxu0
        %938 = vmatprep.mubr.f32.mxu0 0.0
        %939 = vmatmul.mubr.f32.gmra.mrb[0].mxu0 %v833
        %v940 = vpop.f32.mrb[0].mxu0
        %v941 = vadd.f32 %v867, %v940
        %v942 = vpop.f32.mrb[0].mxu0
        %943 = vmatprep.mubr.f32.mxu0 0.0
        %944 = vmatmul.mubr.f32.gmra.mrb[0].mxu0 %v835
        %v945 = vpop.f32.mrb[0].mxu0
        %v946 = vadd.f32 %v867, %v945
        %v947 = vpop.f32.mrb[0].mxu0
        %948 = vmatprep.mubr.f32.mxu0 0.0
        %949 = vmatmul.mubr.f32.gmra.mrb[0].mxu0 %v837
        %v950 = vpop.f32.mrb[0].mxu0
        %v951 = vadd.f32 %v867, %v950
        %v952 = vpop.f32.mrb[0].mxu0
        %953 = vmatprep.mubr.f32.mxu0 0.0
        %954 = vmatmul.mubr.f32.gmra.mrb[0].mxu0 %v839
        %v955 = vpop.f32.mrb[0].mxu0
        %v956 = vadd.f32 %v867, %v955
        %v957 = vpop.f32.mrb[0].mxu0
        %958 = vmatprep.mubr.f32.mxu0 0.0
        %959 = vmatmul.mubr.f32.gmra.mrb[0].mxu0 %v841
        %v960 = vpop.f32.mrb[0].mxu0
        %v961 = vadd.f32 %v867, %v960
        %v962 = vpop.f32.mrb[0].mxu0
        %963 = vmatprep.mubr.f32.mxu0 0.0
        %964 = vmatmul.mubr.f32.gmra.mrb[0].mxu0 %v843
        %v965 = vpop.f32.mrb[0].mxu0
        %v966 = vadd.f32 %v867, %v965
        %v967 = vpop.f32.mrb[0].mxu0
        %968 = vmatprep.mubr.f32.mxu0 0.0
        %969 = vmatmul.mubr.f32.gmra.mrb[0].mxu0 %v845
        %v970 = vpop.f32.mrb[0].mxu0
        %v971 = vadd.f32 %v867, %v970
        %v972 = vpop.f32.mrb[0].mxu0
        %973 = vdwg.mxu0
        %v974 = vxor.u32 %v936, 2147483648
        %v975 = vxor.u32 %v941, 2147483648
        %v976 = vxor.u32 %v946, 2147483648
        %v977 = vxor.u32 %v951, 2147483648
        %v978 = vxor.u32 %v956, 2147483648
        %v979 = vxor.u32 %v961, 2147483648
        %v980 = vxor.u32 %v966, 2147483648
        %v981 = vxor.u32 %v971, 2147483648
        %v982 = vmul.f32 %v974, 1.442695
        %v983 = vpow.pop %v982
        %v984 = vmul.f32 %v975, 1.442695
        %v985 = vpow.pop %v984
        %v986 = vmul.f32 %v976, 1.442695
        %v987 = vpow.pop %v986
        %v988 = vmul.f32 %v977, 1.442695
        %v989 = vpow.pop %v988
        %v990 = vmul.f32 %v978, 1.442695
        %v991 = vpow.pop %v990
        %v992 = vmul.f32 %v979, 1.442695
        %v993 = vpow.pop %v992
        %v994 = vmul.f32 %v980, 1.442695
        %v995 = vpow.pop %v994
        %v996 = vmul.f32 %v981, 1.442695
        %v997 = vpow.pop %v996
        %v998 = vadd.f32 %v983, 1.0
        %v999 = vadd.f32 %v985, 1.0
        %v1000 = vadd.f32 %v987, 1.0
        %v1001 = vadd.f32 %v989, 1.0
        %v1002 = vadd.f32 %v991, 1.0
        %v1003 = vadd.f32 %v993, 1.0
        %v1004 = vadd.f32 %v995, 1.0
        %v1005 = vadd.f32 %v997, 1.0
        %v1006 = vrcp.pop %v998
        %v1007 = vmul.f32 1.0, %v1006
        %v1008 = vrcp.pop %v999
        %v1009 = vmul.f32 1.0, %v1008
        %v1010 = vrcp.pop %v1000
        %v1011 = vmul.f32 1.0, %v1010
        %v1012 = vrcp.pop %v1001
        %v1013 = vmul.f32 1.0, %v1012
        %v1014 = vrcp.pop %v1002
        %v1015 = vmul.f32 1.0, %v1014
        %v1016 = vrcp.pop %v1003
        %v1017 = vmul.f32 1.0, %v1016
        %v1018 = vrcp.pop %v1004
        %v1019 = vmul.f32 1.0, %v1018
        %v1020 = vrcp.pop %v1005
        %v1021 = vmul.f32 1.0, %v1020
        %v1022 = vld [vmem:[#allocation14] sm:$0xff]
        %v1023 = vld [vmem:[#allocation14 + $0x8] sm:$0xff]
        %v1024 = vld [vmem:[#allocation14 + $0x10] sm:$0xff]
        %v1025 = vld [vmem:[#allocation14 + $0x18] sm:$0xff]
        %v1026 = vld [vmem:[#allocation14 + $0x20] sm:$0xff]
        %v1027 = vld [vmem:[#allocation14 + $0x28] sm:$0xff]
        %v1028 = vld [vmem:[#allocation14 + $0x30] sm:$0xff]
        %v1029 = vld [vmem:[#allocation14 + $0x38] sm:$0xff]
        %v1030 = vld [vmem:[#allocation14 + $0x40] sm:$0xff]
        %v1031 = vld [vmem:[#allocation14 + $0x48] sm:$0xff]
        %v1032 = vld [vmem:[#allocation14 + $0x50] sm:$0xff]
        %v1033 = vld [vmem:[#allocation14 + $0x58] sm:$0xff]
        %v1034 = vld [vmem:[#allocation14 + $0x60] sm:$0xff]
        %v1035 = vld [vmem:[#allocation14 + $0x68] sm:$0xff]
        %v1036 = vld [vmem:[#allocation14 + $0x70] sm:$0xff]
        %v1037 = vld [vmem:[#allocation14 + $0x78] sm:$0xff]
        %v1038 = vld [vmem:[#allocation14 + $0x80] sm:$0xff]
        %v1039 = vld [vmem:[#allocation14 + $0x88] sm:$0xff]
        %v1040 = vld [vmem:[#allocation14 + $0x90] sm:$0xff]
        %v1041 = vld [vmem:[#allocation14 + $0x98] sm:$0xff]
        %v1042 = vld [vmem:[#allocation14 + $0xa0] sm:$0xff]
        %v1043 = vld [vmem:[#allocation14 + $0xa8] sm:$0xff]
        %v1044 = vld [vmem:[#allocation14 + $0xb0] sm:$0xff]
        %v1045 = vld [vmem:[#allocation14 + $0xb8] sm:$0xff]
        %v1046 = vld [vmem:[#allocation14 + $0xc0] sm:$0xff]
        %v1047 = vld [vmem:[#allocation14 + $0xc8] sm:$0xff]
        %v1048 = vld [vmem:[#allocation14 + $0xd0] sm:$0xff]
        %v1049 = vld [vmem:[#allocation14 + $0xd8] sm:$0xff]
        %v1050 = vld [vmem:[#allocation14 + $0xe0] sm:$0xff]
        %v1051 = vld [vmem:[#allocation14 + $0xe8] sm:$0xff]
        %v1052 = vld [vmem:[#allocation14 + $0xf0] sm:$0xff]
        %v1053 = vld [vmem:[#allocation14 + $0xf8] sm:$0xff]
        %v1054 = vld [vmem:[#allocation16] sm:$0x3]
        %v1056 = vlaneseq
        %v1057 = vshrl.u32 %v1056, 7
        %v1058 = vsub.s32 0, %v1057
        %v1059 = vrot.slane %v1054, %v1058
        %v1060 = vlaneseq
        %v1061 = vshrl.u32 %v1060, 7
        %v1062 = vsub.s32 1, %v1061
        %v1063 = vrot.slane %v1054, %v1062
        %1066 = vmatprep.subr.mxu0 %v1023
        %1067 = vmatpush1.msra.mxu0 %v1022
        %1068 = vmatprep.subr.mxu0 %v1025
        %1069 = vmatpush1.msra.mxu0 %v1024
        %1070 = vmatprep.subr.mxu0 %v1027
        %1071 = vmatpush1.msra.mxu0 %v1026
        %1072 = vmatprep.subr.mxu0 %v1029
        %1073 = vmatpush1.msra.mxu0 %v1028
        %1074 = vmatprep.subr.mxu0 %v1031
        %1075 = vmatpush1.msra.mxu0 %v1030
        %1076 = vmatprep.subr.mxu0 %v1033
        %1077 = vmatpush1.msra.mxu0 %v1032
        %1078 = vmatprep.subr.mxu0 %v1035
        %1079 = vmatpush1.msra.mxu0 %v1034
        %1080 = vmatprep.subr.mxu0 %v1037
        %1081 = vmatpush1.msra.mxu0 %v1036
        %1082 = vmatprep.subr.mxu0 %v1039
        %1083 = vmatpush1.msra.mxu0 %v1038
        %1084 = vmatprep.subr.mxu0 %v1041
        %1085 = vmatpush1.msra.mxu0 %v1040
        %1086 = vmatprep.subr.mxu0 %v1043
        %1087 = vmatpush1.msra.mxu0 %v1042
        %1088 = vmatprep.subr.mxu0 %v1045
        %1089 = vmatpush1.msra.mxu0 %v1044
        %1090 = vmatprep.subr.mxu0 %v1047
        %1091 = vmatpush1.msra.mxu0 %v1046
        %1092 = vmatprep.subr.mxu0 %v1049
        %1093 = vmatpush1.msra.mxu0 %v1048
        %1094 = vmatprep.subr.mxu0 %v1051
        %1095 = vmatpush1.msra.mxu0 %v1050
        %1096 = vmatprep.subr.mxu0 %v1053
        %1097 = vmatpush1.msra.mxu0 %v1052
        %1098 = vmatprep.subr.mxu0 0.0
        %1099 = vmatpush1.msra.mxu0 0.0
        %1100 = vmatprep.subr.mxu0 0.0
        %1101 = vmatpush1.msra.mxu0 0.0
        %1102 = vmatprep.subr.mxu0 0.0
        %1103 = vmatpush1.msra.mxu0 0.0
        %1104 = vmatprep.subr.mxu0 0.0
        %1105 = vmatpush1.msra.mxu0 0.0
        %1106 = vmatprep.subr.mxu0 0.0
        %1107 = vmatpush1.msra.mxu0 0.0
        %1108 = vmatprep.subr.mxu0 0.0
        %1109 = vmatpush1.msra.mxu0 0.0
        %1110 = vmatprep.subr.mxu0 0.0
        %1111 = vmatpush1.msra.mxu0 0.0
        %1112 = vmatprep.subr.mxu0 0.0
        %1113 = vmatpush1.msra.mxu0 0.0
        %1114 = vmatprep.subr.mxu0 0.0
        %1115 = vmatpush1.msra.mxu0 0.0
        %1116 = vmatprep.subr.mxu0 0.0
        %1117 = vmatpush1.msra.mxu0 0.0
        %1118 = vmatprep.subr.mxu0 0.0
        %1119 = vmatpush1.msra.mxu0 0.0
        %1120 = vmatprep.subr.mxu0 0.0
        %1121 = vmatpush1.msra.mxu0 0.0
        %1122 = vmatprep.subr.mxu0 0.0
        %1123 = vmatpush1.msra.mxu0 0.0
        %1124 = vmatprep.subr.mxu0 0.0
        %1125 = vmatpush1.msra.mxu0 0.0
        %1126 = vmatprep.subr.mxu0 0.0
        %1127 = vmatpush1.msra.mxu0 0.0
        %1128 = vmatprep.subr.mxu0 0.0
        %1129 = vmatpush1.msra.mxu0 0.0
        %1130 = vmatprep.mubr.f32.mxu0 0.0
        %1131 = vmatmul.mubr.f32.gmra.mrb[0].mxu0 %v1007
        %v1132 = vpop.f32.mrb[0].mxu0
        %v1133 = vadd.f32 %v1059, %v1132
        %v1134 = vpop.f32.mrb[0].mxu0
        %v1135 = vadd.f32 %v1063, %v1134
        %1136 = vmatprep.mubr.f32.mxu0 0.0
        %1137 = vmatmul.mubr.f32.gmra.mrb[0].mxu0 %v1009
        %v1138 = vpop.f32.mrb[0].mxu0
        %v1139 = vadd.f32 %v1059, %v1138
        %v1140 = vpop.f32.mrb[0].mxu0
        %v1141 = vadd.f32 %v1063, %v1140
        %1142 = vmatprep.mubr.f32.mxu0 0.0
        %1143 = vmatmul.mubr.f32.gmra.mrb[0].mxu0 %v1011
        %v1144 = vpop.f32.mrb[0].mxu0
        %v1145 = vadd.f32 %v1059, %v1144
        %v1146 = vpop.f32.mrb[0].mxu0
        %v1147 = vadd.f32 %v1063, %v1146
        %1148 = vmatprep.mubr.f32.mxu0 0.0
        %1149 = vmatmul.mubr.f32.gmra.mrb[0].mxu0 %v1013
        %v1150 = vpop.f32.mrb[0].mxu0
        %v1151 = vadd.f32 %v1059, %v1150
        %v1152 = vpop.f32.mrb[0].mxu0
        %v1153 = vadd.f32 %v1063, %v1152
        %1154 = vmatprep.mubr.f32.mxu0 0.0
        %1155 = vmatmul.mubr.f32.gmra.mrb[0].mxu0 %v1015
        %v1156 = vpop.f32.mrb[0].mxu0
        %v1157 = vadd.f32 %v1059, %v1156
        %v1158 = vpop.f32.mrb[0].mxu0
        %v1159 = vadd.f32 %v1063, %v1158
        %1160 = vmatprep.mubr.f32.mxu0 0.0
        %1161 = vmatmul.mubr.f32.gmra.mrb[0].mxu0 %v1017
        %v1162 = vpop.f32.mrb[0].mxu0
        %v1163 = vadd.f32 %v1059, %v1162
        %v1164 = vpop.f32.mrb[0].mxu0
        %v1165 = vadd.f32 %v1063, %v1164
        %1166 = vmatprep.mubr.f32.mxu0 0.0
        %1167 = vmatmul.mubr.f32.gmra.mrb[0].mxu0 %v1019
        %v1168 = vpop.f32.mrb[0].mxu0
        %v1169 = vadd.f32 %v1059, %v1168
        %v1170 = vpop.f32.mrb[0].mxu0
        %v1171 = vadd.f32 %v1063, %v1170
        %1172 = vmatprep.mubr.f32.mxu0 0.0
        %1173 = vmatmul.mubr.f32.gmra.mrb[0].mxu0 %v1021
        %v1174 = vpop.f32.mrb[0].mxu0
        %v1175 = vadd.f32 %v1059, %v1174
        %v1176 = vpop.f32.mrb[0].mxu0
        %v1177 = vadd.f32 %v1063, %v1176
        %1178 = vdwg.mxu0
        %1179 = vst [vmem:[%s459] sm:$0xff] %v1133
        %1180 = vst [vmem:[%s459 + $0x8] sm:$0xff] %v1135
        %1181 = vst [vmem:[%s459 + $0x10] sm:$0xff] %v1139
        %1182 = vst [vmem:[%s459 + $0x18] sm:$0xff] %v1141
        %1183 = vst [vmem:[%s459 + $0x20] sm:$0xff] %v1145
        %1184 = vst [vmem:[%s459 + $0x28] sm:$0xff] %v1147
        %1185 = vst [vmem:[%s459 + $0x30] sm:$0xff] %v1151
        %1186 = vst [vmem:[%s459 + $0x38] sm:$0xff] %v1153
        %1187 = vst [vmem:[%s459 + $0x40] sm:$0xff] %v1157
        %1188 = vst [vmem:[%s459 + $0x48] sm:$0xff] %v1159
        %1189 = vst [vmem:[%s459 + $0x50] sm:$0xff] %v1163
        %1190 = vst [vmem:[%s459 + $0x58] sm:$0xff] %v1165
        %1191 = vst [vmem:[%s459 + $0x60] sm:$0xff] %v1169
        %1192 = vst [vmem:[%s459 + $0x68] sm:$0xff] %v1171
        %1193 = vst [vmem:[%s459 + $0x70] sm:$0xff] %v1175
        %1194 = vst [vmem:[%s459 + $0x78] sm:$0xff] %v1177
        %s1195 = sand.u32 %s232, 1
        %s1196 = scalar_lea.sflag [#allocation4], %s1195
        %s1197 = sand.u32 %s232, 1
        %s1198 = smul.addr %s1197, 128
        %s1199 = scalar_lea.vmem [#allocation17], %s1198
        // Predicated region
        $region93: #{tpu_custom_call.1} parent=55 // pred_check
          %p1200 = pneg %p242
        $region94: #{tpu_custom_call.1} parent=55 // pred_check_branch
          %1202 = sbr.rel (%p1200) target = $region96
        $region95: #{tpu_custom_call.1} parent=55 // pred_region
          %s1203 = smul.u32 8, %s30
          %s1205 = ssub.s32 2048, 2048
          %1206 = vsyncadd %s1196, %s1205
          %s1207 = smul.addr %s1203, 2
          %s1208 = smul.addr %s1207, 128
          %s1209 = scalar_lea.hbm %s9, %s1208
          %s1210 = sshll.u32 %s1199, 4
          %s1211 = int_to_ptr.vmem [resolvable:$true] %s1210
          %1216 = dma.vmem_to_hbm [thread:$0]  %s1211, 2048, %s1209, %s1196, 256, 256, 16
        $region96: #{tpu_custom_call.1} parent=55 // pred_fallthru
          _
      $region56: #{tpu_custom_call.1} parent=5 // pred_fallthru
        _
      %p1217 = scmp.le.s32.totalorder 2, %s25
      // Predicated region
      $region97: #{tpu_custom_call.1} parent=5 // pred_check
        %p1218 = pneg %p1217
      $region98: #{tpu_custom_call.1} parent=5 // pred_check_branch
        %1220 = sbr.rel (%p1218) target = $region100
      $region99: #{tpu_custom_call.1} parent=5 // pred_region
        %s1221 = ssub.s32 %s25, 2
        // Predicated region
        $region101: #{tpu_custom_call.1} parent=99 // pred_check
          %p1222 = pneg %p248
        $region102: #{tpu_custom_call.1} parent=99 // pred_check_branch
          %1224 = sbr.rel (%p1222) target = $region104
        $region103: #{tpu_custom_call.1} parent=99 // pred_region
          %s1225 = sand.u32 %s233, 1
          %s1226 = scalar_lea.sflag [#allocation4], %s1225
          %s1227 = sand.u32 %s233, 1
          %s1228 = smul.addr %s1227, 128
          %s1229 = scalar_lea.vmem [#allocation17], %s1228
          %1230 = dma.done %s1226, 2048
        $region104: #{tpu_custom_call.1} parent=99 // pred_fallthru
          _
      $region100: #{tpu_custom_call.1} parent=5 // pred_fallthru
        _
    $region6: #{tpu_custom_call.1} parent=1 // loop_footer
      %s29 = sadd.s32 1, %s25
    $region7: #{tpu_custom_call.1} parent=1 // loop_footer_branch
      %24 = sbr.rel target = $region3
    $region8: #{tpu_custom_call.1} parent=1 // loop_exit
      _
    %1231 = vsyncpa [#allocation3], 1
    %s1232 = scalar_lea.sflag [#allocation3], 1
    %1233 = vsyncpa %s1232, 1
    %1234 = vsyncpa [#allocation6], 1
    %1235 = vsyncpa [#allocation9], 1
    %1236 = vsyncpa [#allocation12], 1
    %1237 = vsyncpa [#allocation15], 1
    %1238 = vsyncpa [#allocation4], 1
    %s1239 = scalar_lea.sflag [#allocation4], 1
    %1240 = vsyncpa %s1239, 1

</llo_original>
